<compile_context>
chip_gen: v7x
topology: tpu7x:2x2x1
jax: 0.10.0
libtpu: 0.0.40
codegen_flags: <defaults>
</compile_context>

<pallas_src>
import functools

import jax
import jax.numpy as jnp
from jax import lax
from jax.experimental import pallas as pl
from jax.experimental.pallas import tpu as pltpu

_THRESH = 1.25 ** 3          # 1.953125 (exactly representable in f32)
_LANES = 128
_MAX_ROW_TILE = 1024         # 1024 x 128 f32 = 512 KiB per input block
_CORE_SPLITS = 2             # parallel axis: megacore split on v7x, no-op on v5e/v6e


def _classify(p, t):
    """valid / good boolean masks, divide-free (VALU only)."""
    thr = jnp.float32(_THRESH)
    valid = t > 0.0
    within = jnp.logical_and(p < thr * t, t < thr * p)
    # Negative pred with positive target: max(p/t, t/p) is negative < thresh,
    # i.e. the PyTorch reference counts it as "good" -> keep that behaviour.
    good = jnp.logical_and(valid, jnp.logical_or(within, p < 0.0))
    return valid, good


def _a3_counts_kernel(row_tile, bpc, nrows_ref, pred_ref, target_ref,
                      valid_ref, good_ref):
    c = pl.program_id(0)   # core split (parallel)
    i = pl.program_id(1)   # reduction step (arbitrary)

    @pl.when(i == 0)
    def _():
        valid_ref[...] = jnp.zeros_like(valid_ref)
        good_ref[...] = jnp.zeros_like(good_ref)

    p = pred_ref[...].astype(jnp.float32)
    t = target_ref[...].astype(jnp.float32)

    # Mask rows past the real end of the input: the last block of each core's
    # range may be a partial edge block or a clamped (duplicated) block.
    row_start = (c * bpc + i) * row_tile
    row_ids = row_start + lax.broadcasted_iota(jnp.int32, (row_tile, _LANES), 0)
    in_bounds = row_ids < nrows_ref[0]

    valid, good = _classify(p, t)
    valid = jnp.logical_and(valid, in_bounds)
    good = jnp.logical_and(good, in_bounds)

    # Pure element-wise accumulation; no per-step cross-lane reduction and no
    # lane-width-1 stores inside the loop.
    valid_ref[...] += valid.astype(jnp.float32)
    good_ref[...] += good.astype(jnp.float32)


def a3_metric(pred, target):
    """JAX/Pallas implementation of A3.forward (returns a scalar f32 array)."""
    assert pred.shape == target.shape
    n = pred.size

    # Keep the caller's dtype (bf16 stays bf16 -> half the HBM bytes);
    # the kernel up-casts per tile.
    p_flat = pred.reshape(-1)
    t_flat = target.reshape(-1)

    # Main portion handled by the kernel: a multiple of 8*128 elements, no pad.
    n_main = (n // (8 * _LANES)) * (8 * _LANES)

    valid_cnt = jnp.int32(0)
    good_cnt = jnp.int32(0)

    if n_main > 0:
        rows = n_main // _LANES                      # multiple of 8
        p2 = p_flat[:n_main].reshape(rows, _LANES)
        t2 = t_flat[:n_main].reshape(rows, _LANES)

        row_tile = min(_MAX_ROW_TILE, rows)          # multiple of 8 by construction
        num_blocks = pl.cdiv(rows, row_tile)
        bpc = pl.cdiv(num_blocks, _CORE_SPLITS)      # blocks per core

        def in_map(c, i, nrows_ref):
            # Clamp so logical blocks past the end re-read the last real block;
            # their contribution is masked out inside the kernel.
            return (jnp.minimum(c * bpc + i, num_blocks - 1), 0)

        def out_map(c, i, nrows_ref):
            return (c, 0)

        kernel = functools.partial(_a3_counts_kernel, row_tile, bpc)
        nrows_arr = jnp.array([rows], dtype=jnp.int32)

        valid_part, good_part = pl.pallas_call(
            kernel,
            out_shape=(
                jax.ShapeDtypeStruct((_CORE_SPLITS * row_tile, _LANES), jnp.float32),
                jax.ShapeDtypeStruct((_CORE_SPLITS * row_tile, _LANES), jnp.float32),
            ),
            grid_spec=pltpu.PrefetchScalarGridSpec(
                num_scalar_prefetch=1,
                grid=(_CORE_SPLITS, bpc),
                in_specs=[
                    pl.BlockSpec((row_tile, _LANES), in_map),
                    pl.BlockSpec((row_tile, _LANES), in_map),
                ],
                out_specs=[
                    pl.BlockSpec((row_tile, _LANES), out_map),
                    pl.BlockSpec((row_tile, _LANES), out_map),
                ],
            ),
            compiler_params=pltpu.CompilerParams(
                dimension_semantics=("parallel", "arbitrary"),
            ),
        )(nrows_arr, p2, t2)

        # Exact integer counts (int32 safe up to ~2.1e9 pixels).
        valid_cnt = valid_cnt + jnp.sum(valid_part.astype(jnp.int32))
        good_cnt = good_cnt + jnp.sum(good_part.astype(jnp.int32))

    if n_main < n:
        # Ragged tail (< 1024 elements): tiny pure-JAX epilogue.
        pt = p_flat[n_main:].astype(jnp.float32)
        tt = t_flat[n_main:].astype(jnp.float32)
        v, g = _classify(pt, tt)
        valid_cnt = valid_cnt + jnp.sum(v.astype(jnp.int32))
        good_cnt = good_cnt + jnp.sum(g.astype(jnp.int32))

    acc = good_cnt.astype(jnp.float32) / jnp.maximum(valid_cnt, 1).astype(jnp.float32)
    # TODO(synk): PyTorch returns a Python scalar / early -1 via .item(); here a
    # traced scalar with a -1 sentinel is returned instead.
    return jnp.where(valid_cnt < 10, jnp.float32(-1.0), acc)


def _a3_reference(pred, target):
    """Pure-JAX reference mirroring the PyTorch module (divide-based)."""
    valid = target > 0
    num = jnp.sum(valid)
    safe_t = jnp.where(valid, target, 1.0)
    safe_p = jnp.where(pred != 0.0, pred, 1e-30)
    thresh = jnp.maximum(pred / safe_t, target / safe_p)
    good = jnp.logical_and(valid, thresh < _THRESH).astype(jnp.float32)
    acc = jnp.sum(good) / jnp.maximum(num.astype(jnp.float32), 1.0)
    return jnp.where(num < 10, jnp.float32(-1.0), acc)


if __name__ == "__main__":
    key = jax.random.PRNGKey(0)
    k1, k2, k3 = jax.random.split(key, 3)

    B, C, H, W = 2, 4, 16, 16
    # target: positive depths with ~25% invalid (zero) pixels
    target = jax.random.uniform(k1, (B, C, H, W), jnp.float32, 0.5, 10.0)
    invalid_mask = jax.random.uniform(k2, (B, C, H, W)) < 0.25
    target = jnp.where(invalid_mask, 0.0, target)
    # pred: target scaled by a random factor near 1 (some outside 1.25^3)
    scale = jax.random.uniform(k3, (B, C, H, W), jnp.float32, 0.4, 2.5)
    pred = target * scale + 0.1  # keep pred positive even where target == 0

    out = a3_metric(pred, target)
    out = jax.block_until_ready(out)

    ref = _a3_reference(pred.astype(jnp.float32), target.astype(jnp.float32))
    assert jnp.allclose(out, ref, atol=1e-6), (out, ref)

    print("KERNEL_OK")
</pallas_src>

<mosaic_0001>
module attributes {stable_mosaic.version = 11 : i64} {
  func.func @_a3_counts_kernel(%arg0: i32, %arg1: i32, %arg2: memref<1xi32, #tpu.memory_space<smem>>, %arg3: memref<16x128xf32, #tpu.memory_space<vmem>>, %arg4: memref<16x128xf32, #tpu.memory_space<vmem>>, %arg5: memref<16x128xf32, #tpu.memory_space<vmem>>, %arg6: memref<16x128xf32, #tpu.memory_space<vmem>>) attributes {dimension_semantics = [#tpu.dimension_semantics<parallel>, #tpu.dimension_semantics<arbitrary>], iteration_bounds = array<i64: 2, 1>, scalar_prefetch = 1 : i64, scratch_operands = 0 : i64, tpu.core_type = #tpu.core_type<tc>, window_params = [{transform_indices = @transform_0, window_bounds = array<i64: 16, 128>}, {transform_indices = @transform_1, window_bounds = array<i64: 16, 128>}, {transform_indices = @transform_2, window_bounds = array<i64: 16, 128>}, {transform_indices = @transform_3, window_bounds = array<i64: 16, 128>}]} {
    %c0_i32 = arith.constant 0 : i32
    %0 = arith.cmpi eq, %arg1, %c0_i32 : i32
    %1 = arith.extui %0 : i1 to i32
    %c0_i32_0 = arith.constant 0 : i32
    %2 = arith.cmpi ne, %1, %c0_i32_0 : i32
    scf.if %2 {
      %cst_16 = arith.constant 0.000000e+00 : f32
      %39 = vector.broadcast %cst_16 : f32 to vector<16x128xf32>
      %c0_17 = arith.constant 0 : index
      %c0_18 = arith.constant 0 : index
      %40 = vector.load %arg5[%c0_17, %c0_18] : memref<16x128xf32, #tpu.memory_space<vmem>>, vector<16x128xf32>
      tpu.vector_store %arg5[%c0_17, %c0_18], %39 {strides = array<i32>} : memref<16x128xf32, #tpu.memory_space<vmem>>, vector<16x128xf32>,
      %cst_19 = arith.constant 0.000000e+00 : f32
      %41 = vector.broadcast %cst_19 : f32 to vector<16x128xf32>
      %c0_20 = arith.constant 0 : index
      %c0_21 = arith.constant 0 : index
      %42 = vector.load %arg6[%c0_20, %c0_21] : memref<16x128xf32, #tpu.memory_space<vmem>>, vector<16x128xf32>
      tpu.vector_store %arg6[%c0_20, %c0_21], %41 {strides = array<i32>} : memref<16x128xf32, #tpu.memory_space<vmem>>, vector<16x128xf32>,
    } else {
    }
    %c0 = arith.constant 0 : index
    %c0_1 = arith.constant 0 : index
    %3 = vector.load %arg3[%c0, %c0_1] : memref<16x128xf32, #tpu.memory_space<vmem>>, vector<16x128xf32>
    %c0_2 = arith.constant 0 : index
    %c0_3 = arith.constant 0 : index
    %4 = vector.load %arg4[%c0_2, %c0_3] : memref<16x128xf32, #tpu.memory_space<vmem>>, vector<16x128xf32>
    %c1_i32 = arith.constant 1 : i32
    %5 = arith.muli %arg0, %c1_i32 : i32
    %6 = arith.addi %5, %arg1 : i32
    %c16_i32 = arith.constant 16 : i32
    %7 = arith.muli %6, %c16_i32 : i32
    %8 = tpu.iota {dimensions = array<i32: 0>} : vector<16x128xi32>
    %9 = vector.broadcast %7 : i32 to vector<16x128xi32>
    %10 = arith.addi %9, %8 : vector<16x128xi32>
    %c0_4 = arith.constant 0 : index
    %11 = memref.load %arg2[%c0_4] : memref<1xi32, #tpu.memory_space<smem>>
    %12 = vector.broadcast %11 : i32 to vector<16x128xi32>
    %13 = arith.cmpi slt, %10, %12 : vector<16x128xi32>
    %cst = arith.constant 0.000000e+00 : f32
    %14 = vector.broadcast %cst : f32 to vector<16x128xf32>
    %15 = arith.cmpf ogt, %4, %14 : vector<16x128xf32>
    %cst_5 = arith.constant 1.953125 : f32
    %16 = vector.broadcast %cst_5 : f32 to vector<16x128xf32>
    %17 = arith.mulf %16, %4 : vector<16x128xf32>
    %18 = arith.cmpf olt, %3, %17 : vector<16x128xf32>
    %cst_6 = arith.constant 1.953125 : f32
    %19 = vector.broadcast %cst_6 : f32 to vector<16x128xf32>
    %20 = arith.mulf %19, %3 : vector<16x128xf32>
    %21 = arith.cmpf olt, %4, %20 : vector<16x128xf32>
    %22 = arith.andi %18, %21 : vector<16x128xi1>
    %cst_7 = arith.constant 0.000000e+00 : f32
    %23 = vector.broadcast %cst_7 : f32 to vector<16x128xf32>
    %24 = arith.cmpf olt, %3, %23 : vector<16x128xf32>
    %25 = arith.ori %22, %24 : vector<16x128xi1>
    %26 = arith.andi %15, %25 : vector<16x128xi1>
    %27 = arith.andi %15, %13 : vector<16x128xi1>
    %28 = arith.andi %26, %13 : vector<16x128xi1>
    %c0_8 = arith.constant 0 : index
    %c0_9 = arith.constant 0 : index
    %29 = vector.load %arg5[%c0_8, %c0_9] : memref<16x128xf32, #tpu.memory_space<vmem>>, vector<16x128xf32>
    %30 = arith.extui %27 : vector<16x128xi1> to vector<16x128xi32>
    %31 = arith.sitofp %30 : vector<16x128xi32> to vector<16x128xf32>
    %32 = arith.addf %29, %31 : vector<16x128xf32>
    %c0_10 = arith.constant 0 : index
    %c0_11 = arith.constant 0 : index
    %33 = vector.load %arg5[%c0_10, %c0_11] : memref<16x128xf32, #tpu.memory_space<vmem>>, vector<16x128xf32>
    tpu.vector_store %arg5[%c0_10, %c0_11], %32 {strides = array<i32>} : memref<16x128xf32, #tpu.memory_space<vmem>>, vector<16x128xf32>,
    %c0_12 = arith.constant 0 : index
    %c0_13 = arith.constant 0 : index
    %34 = vector.load %arg6[%c0_12, %c0_13] : memref<16x128xf32, #tpu.memory_space<vmem>>, vector<16x128xf32>
    %35 = arith.extui %28 : vector<16x128xi1> to vector<16x128xi32>
    %36 = arith.sitofp %35 : vector<16x128xi32> to vector<16x128xf32>
    %37 = arith.addf %34, %36 : vector<16x128xf32>
    %c0_14 = arith.constant 0 : index
    %c0_15 = arith.constant 0 : index
    %38 = vector.load %arg6[%c0_14, %c0_15] : memref<16x128xf32, #tpu.memory_space<vmem>>, vector<16x128xf32>
    tpu.vector_store %arg6[%c0_14, %c0_15], %37 {strides = array<i32>} : memref<16x128xf32, #tpu.memory_space<vmem>>, vector<16x128xf32>,
    return
  }
  func.func @transform_0(%arg0: i32, %arg1: i32, %arg2: memref<1xi32, #tpu.memory_space<smem>>) -> (i32, i32) {
    %c1_i32 = arith.constant 1 : i32
    %0 = arith.muli %arg0, %c1_i32 : i32
    %1 = arith.addi %0, %arg1 : i32
    %c0_i32 = arith.constant 0 : i32
    %2 = arith.minsi %1, %c0_i32 : i32
    %c0_i32_0 = arith.constant 0 : i32
    %c0_i32_1 = arith.constant 0 : i32
    return %2, %c0_i32_0 : i32, i32
  }
  func.func @transform_1(%arg0: i32, %arg1: i32, %arg2: memref<1xi32, #tpu.memory_space<smem>>) -> (i32, i32) {
    %c1_i32 = arith.constant 1 : i32
    %0 = arith.muli %arg0, %c1_i32 : i32
    %1 = arith.addi %0, %arg1 : i32
    %c0_i32 = arith.constant 0 : i32
    %2 = arith.minsi %1, %c0_i32 : i32
    %c0_i32_0 = arith.constant 0 : i32
    %c0_i32_1 = arith.constant 0 : i32
    return %2, %c0_i32_0 : i32, i32
  }
  func.func @transform_2(%arg0: i32, %arg1: i32, %arg2: memref<1xi32, #tpu.memory_space<smem>>) -> (i32, i32) {
    %c0_i32 = arith.constant 0 : i32
    %c0_i32_0 = arith.constant 0 : i32
    return %arg0, %c0_i32 : i32, i32
  }
  func.func @transform_3(%arg0: i32, %arg1: i32, %arg2: memref<1xi32, #tpu.memory_space<smem>>) -> (i32, i32) {
    %c0_i32 = arith.constant 0 : i32
    %c0_i32_0 = arith.constant 0 : i32
    return %arg0, %c0_i32 : i32, i32
  }
}

</mosaic_0001>

<llo_original>
// kernel: tpu_custom_call.1
$region0: #{tpu_custom_call.1}
  #allocation0 [shape = 'u32[]', space=smem, size = 0x4, offset = 0x4, fixed_abs, tag = 'smem constant byte address 0x4 - core index']
  #allocation1 [shape = 'u32[144,128]{1,0:T(1,128)}', space=vmem, size = 0x12000, scoped, tag = 'internal scratch']
  #allocation2 [shape = 's32[1]{0}', space=sflag, size = 0x4, scoped, tag = 'scoped memory for tpu_custom_call.1']
  #allocation3 [shape = 's32[1]{0:T(128)S(6)}', space=smem, size = 0x200, scoped, tag = 'prefetched SMEM operand 0']
  %s0 = inlined_call_operand.<no memory space> [shape: s32[1], index: 0, kind: input, shape index: {}]
  %s1 = inlined_call_operand.hbm [shape: f32[16,128], index: 1, kind: input, shape index: {}]
  %s2 = inlined_call_operand.hbm [shape: f32[16,128], index: 2, kind: input, shape index: {}]
  %s3 = inlined_call_operand.hbm [shape: f32[32,128], index: 3, kind: output, shape index: {0}]
  %s4 = inlined_call_operand.hbm [shape: f32[32,128], index: 4, kind: output, shape index: {1}]
  %5 = xla_tuple %s3, %s4
  %s6 = sld [smem:[#allocation0]]
  $region61: #{tpu_custom_call.1} parent=0
    _
  %s8 = ssub.s32 1, %s6
  %s9 = scalar_select 0, %s8, %s6
  %10 = sst [smem:[#allocation3]] %s0
  $region1: #{tpu_custom_call.1} parent=0
    #allocation4 [shape = 'u8[16384]{0}', space=vmem, size = 0x4000, scoped, tag = 'input window, operand 1']
    #allocation5 [shape = 's32[2]{0}', space=sflag, size = 0x8, scoped, tag = 'scoped memory for tpu_custom_call.1']
    #allocation6 [shape = 's32[2]{0}', space=sflag, size = 0x8, scoped, tag = 'scoped memory for tpu_custom_call.1']
    #allocation7 [shape = 'u8[16384]{0}', space=vmem, size = 0x4000, scoped, tag = 'input window, operand 2']
    #allocation8 [shape = 's32[2]{0}', space=sflag, size = 0x8, scoped, tag = 'scoped memory for tpu_custom_call.1']
    #allocation9 [shape = 'u8[16384]{0}', space=vmem, size = 0x4000, scoped, tag = 'output window, operand 0']
    #allocation10 [shape = 'u8[16384]{0}', space=vmem, size = 0x4000, scoped, tag = 'output window, operand 1']
    #allocation11 [shape = 's32[2]{0}', space=sflag, size = 0x8, scoped, tag = 'scoped memory for tpu_custom_call.1']
    %11 = vsyncpa [#allocation5], 0
    %s12 = scalar_lea.sflag [#allocation5], 1
    %13 = vsyncpa %s12, 0
    %14 = vsyncpa [#allocation8], 0
    %s15 = scalar_lea.sflag [#allocation8], 1
    %16 = vsyncpa %s15, 0
    %17 = vsyncpa [#allocation6], 0
    %s18 = scalar_lea.sflag [#allocation6], 1
    %19 = vsyncpa %s18, 0
    %20 = vsyncpa [#allocation11], 0
    %s21 = scalar_lea.sflag [#allocation11], 1
    %22 = vsyncpa %s21, 0
    loop: start=0, step=1, limit=4
    $region2: #{tpu_custom_call.1} parent=1 // loop_pre_header
      _
    $region3: #{tpu_custom_call.1} parent=1 // loop_header
      %s24 = sphi 0, %s28
      %p25 = scmp.ge.s32.totalorder %s24, 4
      %s31 = sphi 0, %s43
      %s32 = sphi 0, %s39
      %s33 = sphi 0, %s31
      %s34 = sphi 0, %s32
      %s35 = sphi 0, %s33
      %s36 = sphi 0, %s34
      %s52 = sphi 0, %s54
      %s55 = sphi 0, %s52
      %s56 = sphi 0, %s55
      %s72 = sphi 0, %s56
      %s84 = sphi 0, %s86
      %s87 = sphi 0, %s84
      %s88 = sphi 0, %s87
      %s104 = sphi 0, %s88
      %s110 = sphi 0, %s112
      %s113 = sphi 0, %s110
      %s114 = sphi 0, %s113
      %s130 = sphi 0, %s114
      %s136 = sphi 0, %s138
      %s139 = sphi 0, %s136
      %s140 = sphi 0, %s139
      %s156 = sphi 0, %s140
    $region4: #{tpu_custom_call.1} parent=1 // loop_header_branch
      %27 = sbr.rel (%p25) target = $region8
    $region5: #{tpu_custom_call.1} parent=1 // loop_body
      %s29 = ssub.s32 %s24, 1
      %s30 = ssub.s32 %s24, 2
      %s37 = sadd.s32 1, %s32
      %p38 = scmp.ge.s32.totalorder %s37, 1
      %s39 = scalar_select %p38, 0, %s37
      %s40 = sadd.s32 1, %s31
      %s41 = scalar_select %p38, %s40, %s31
      %p42 = scmp.ge.s32.totalorder %s41, 2
      %s43 = scalar_select %p42, 0, %s41
      %s44 = sadd.s32 %s31, %s32
      %p45 = scmp.lt.s32.totalorder %s44, 0
      %s46 = scalar_select %p45, %s44, 0
      %s47 = sadd.s32 %s43, %s39
      %p48 = scmp.lt.s32.totalorder %s47, 0
      %s49 = scalar_select %p48, %s47, 0
      %s50 = ssub.s32 %s46, %s49
      %p51 = scmp.eq.s32.totalorder %s50, 0
      %s53 = sadd.s32 %s52, 1
      %s54 = scalar_select %p51, %s52, %s53
      %p57 = pneg %p51
      %p58 = scmp.eq.s32.totalorder %s24, 1
      %p59 = por %p57, %p58
      %p60 = scmp.ne.s32.totalorder %s52, %s55
      %p61 = scmp.eq.s32.totalorder %s24, 0
      %p62 = por %p60, %p61
      %p63 = scmp.ne.s32.totalorder %s52, %s55
      %p64 = scmp.eq.s32.totalorder %s29, 1
      %p65 = por %p63, %p64
      %p66 = scmp.ne.s32.totalorder %s55, %s56
      %p67 = scmp.eq.s32.totalorder %s29, 0
      %p68 = por %p66, %p67
      %p69 = scmp.ne.s32.totalorder %s55, %s56
      %p70 = scmp.eq.s32.totalorder %s30, 1
      %p71 = por %p69, %p70
      %p73 = scmp.ne.s32.totalorder %s56, %s72
      %p74 = scmp.eq.s32.totalorder %s30, 0
      %p75 = por %p73, %p74
      %s76 = sadd.s32 %s31, %s32
      %p77 = scmp.lt.s32.totalorder %s76, 0
      %s78 = scalar_select %p77, %s76, 0
      %s79 = sadd.s32 %s43, %s39
      %p80 = scmp.lt.s32.totalorder %s79, 0
      %s81 = scalar_select %p80, %s79, 0
      %s82 = ssub.s32 %s78, %s81
      %p83 = scmp.eq.s32.totalorder %s82, 0
      %s85 = sadd.s32 %s84, 1
      %s86 = scalar_select %p83, %s84, %s85
      %p89 = pneg %p83
      %p90 = scmp.eq.s32.totalorder %s24, 1
      %p91 = por %p89, %p90
      %p92 = scmp.ne.s32.totalorder %s84, %s87
      %p93 = scmp.eq.s32.totalorder %s24, 0
      %p94 = por %p92, %p93
      %p95 = scmp.ne.s32.totalorder %s84, %s87
      %p96 = scmp.eq.s32.totalorder %s29, 1
      %p97 = por %p95, %p96
      %p98 = scmp.ne.s32.totalorder %s87, %s88
      %p99 = scmp.eq.s32.totalorder %s29, 0
      %p100 = por %p98, %p99
      %p101 = scmp.ne.s32.totalorder %s87, %s88
      %p102 = scmp.eq.s32.totalorder %s30, 1
      %p103 = por %p101, %p102
      %p105 = scmp.ne.s32.totalorder %s88, %s104
      %p106 = scmp.eq.s32.totalorder %s30, 0
      %p107 = por %p105, %p106
      %s108 = ssub.s32 %s31, %s43
      %p109 = scmp.eq.s32.totalorder %s108, 0
      %s111 = sadd.s32 %s110, 1
      %s112 = scalar_select %p109, %s110, %s111
      %p115 = pneg %p109
      %p116 = scmp.eq.s32.totalorder %s24, 1
      %p117 = por %p115, %p116
      %p118 = scmp.ne.s32.totalorder %s110, %s113
      %p119 = scmp.eq.s32.totalorder %s24, 0
      %p120 = por %p118, %p119
      %p121 = scmp.ne.s32.totalorder %s110, %s113
      %p122 = scmp.eq.s32.totalorder %s29, 1
      %p123 = por %p121, %p122
      %p124 = scmp.ne.s32.totalorder %s113, %s114
      %p125 = scmp.eq.s32.totalorder %s29, 0
      %p126 = por %p124, %p125
      %p127 = scmp.ne.s32.totalorder %s113, %s114
      %p128 = scmp.eq.s32.totalorder %s30, 1
      %p129 = por %p127, %p128
      %p131 = scmp.ne.s32.totalorder %s114, %s130
      %p132 = scmp.eq.s32.totalorder %s30, 0
      %p133 = por %p131, %p132
      %s134 = ssub.s32 %s31, %s43
      %p135 = scmp.eq.s32.totalorder %s134, 0
      %s137 = sadd.s32 %s136, 1
      %s138 = scalar_select %p135, %s136, %s137
      %p141 = pneg %p135
      %p142 = scmp.eq.s32.totalorder %s24, 1
      %p143 = por %p141, %p142
      %p144 = scmp.ne.s32.totalorder %s136, %s139
      %p145 = scmp.eq.s32.totalorder %s24, 0
      %p146 = por %p144, %p145
      %p147 = scmp.ne.s32.totalorder %s136, %s139
      %p148 = scmp.eq.s32.totalorder %s29, 1
      %p149 = por %p147, %p148
      %p150 = scmp.ne.s32.totalorder %s139, %s140
      %p151 = scmp.eq.s32.totalorder %s29, 0
      %p152 = por %p150, %p151
      %p153 = scmp.ne.s32.totalorder %s139, %s140
      %p154 = scmp.eq.s32.totalorder %s30, 1
      %p155 = por %p153, %p154
      %p157 = scmp.ne.s32.totalorder %s140, %s156
      %p158 = scmp.eq.s32.totalorder %s30, 0
      %p159 = por %p157, %p158
      %p160 = scmp.le.s32.totalorder 1, %s24
      %p161 = scmp.lt.s32.totalorder %s24, 3
      %p162 = pnand %p160, %p161
      %p163 = pneg %p162
      // Predicated region
      $region9: #{tpu_custom_call.1} parent=5 // pred_check
        _
      $region10: #{tpu_custom_call.1} parent=5 // pred_check_branch
        %165 = sbr.rel (%p162) target = $region12
      $region11: #{tpu_custom_call.1} parent=5 // pred_region
        %s166 = ssub.s32 %s24, 1
      $region12: #{tpu_custom_call.1} parent=5 // pred_fallthru
        _
      %p167 = scmp.lt.s32.totalorder %s24, 2
      // Predicated region
      $region13: #{tpu_custom_call.1} parent=5 // pred_check
        %p168 = pneg %p167
      $region14: #{tpu_custom_call.1} parent=5 // pred_check_branch
        %170 = sbr.rel (%p168) target = $region16
      $region15: #{tpu_custom_call.1} parent=5 // pred_region
        // Predicated region
        $region17: #{tpu_custom_call.1} parent=15 // pred_check
          %p171 = pneg %p62
        $region18: #{tpu_custom_call.1} parent=15 // pred_check_branch
          %173 = sbr.rel (%p171) target = $region20
        $region19: #{tpu_custom_call.1} parent=15 // pred_region
          %s174 = sand.u32 %s52, 1
          %s175 = scalar_lea.sflag [#allocation5], %s174
          %s176 = sand.u32 %s52, 1
          %s177 = smul.addr %s176, 16
          %s178 = scalar_lea.vmem [#allocation4], %s177
          %s179 = sadd.s32 %s31, %s32
          %p180 = scmp.lt.s32.totalorder %s179, 0
          %s181 = scalar_select %p180, %s179, 0
          %s182 = smul.u32 2, %s181
          %s184 = ssub.s32 256, 256
          %185 = vsyncadd %s175, %s184
          %s186 = smul.addr %s182, 128
          %s187 = scalar_lea.hbm %s1, %s186
          %s188 = sshll.u32 %s178, 4
          %s189 = int_to_ptr.vmem [resolvable:$true] %s188
          %194 = dma.hbm_to_vmem [thread:$0]  %s187, 256, %s189, %s175, 128, 128, 8
        $region20: #{tpu_custom_call.1} parent=15 // pred_fallthru
          _
        // Predicated region
        $region21: #{tpu_custom_call.1} parent=15 // pred_check
          %p195 = pneg %p94
        $region22: #{tpu_custom_call.1} parent=15 // pred_check_branch
          %197 = sbr.rel (%p195) target = $region24
        $region23: #{tpu_custom_call.1} parent=15 // pred_region
          %s198 = sand.u32 %s84, 1
          %s199 = scalar_lea.sflag [#allocation8], %s198
          %s200 = sand.u32 %s84, 1
          %s201 = smul.addr %s200, 16
          %s202 = scalar_lea.vmem [#allocation7], %s201
          %s203 = sadd.s32 %s31, %s32
          %p204 = scmp.lt.s32.totalorder %s203, 0
          %s205 = scalar_select %p204, %s203, 0
          %s206 = smul.u32 2, %s205
          %s208 = ssub.s32 256, 256
          %209 = vsyncadd %s199, %s208
          %s210 = smul.addr %s206, 128
          %s211 = scalar_lea.hbm %s2, %s210
          %s212 = sshll.u32 %s202, 4
          %s213 = int_to_ptr.vmem [resolvable:$true] %s212
          %218 = dma.hbm_to_vmem [thread:$0]  %s211, 256, %s213, %s199, 128, 128, 8
        $region24: #{tpu_custom_call.1} parent=15 // pred_fallthru
          _
      $region16: #{tpu_custom_call.1} parent=5 // pred_fallthru
        _
      %p219 = scmp.le.s32.totalorder 1, %s24
      %p220 = scmp.lt.s32.totalorder %s24, 3
      %p221 = pnand %p219, %p220
      %p222 = pneg %p221
      // Predicated region
      $region25: #{tpu_custom_call.1} parent=5 // pred_check
        _
      $region26: #{tpu_custom_call.1} parent=5 // pred_check_branch
        %224 = sbr.rel (%p221) target = $region28
      $region27: #{tpu_custom_call.1} parent=5 // pred_region
        %s225 = ssub.s32 %s24, 1
        %s226 = sand.u32 %s55, 1
        %s227 = scalar_lea.sflag [#allocation5], %s226
        %s228 = sand.u32 %s55, 1
        %s229 = smul.addr %s228, 16
        %s230 = scalar_lea.vmem [#allocation4], %s229
        // Predicated region
        $region29: #{tpu_custom_call.1} parent=27 // pred_check
          %p231 = pneg %p68
        $region30: #{tpu_custom_call.1} parent=27 // pred_check_branch
          %233 = sbr.rel (%p231) target = $region32
        $region31: #{tpu_custom_call.1} parent=27 // pred_region
          %234 = dma.done %s227, 256
        $region32: #{tpu_custom_call.1} parent=27 // pred_fallthru
          _
        %s235 = sand.u32 %s87, 1
        %s236 = scalar_lea.sflag [#allocation8], %s235
        %s237 = sand.u32 %s87, 1
        %s238 = smul.addr %s237, 16
        %s239 = scalar_lea.vmem [#allocation7], %s238
        // Predicated region
        $region33: #{tpu_custom_call.1} parent=27 // pred_check
          %p240 = pneg %p100
        $region34: #{tpu_custom_call.1} parent=27 // pred_check_branch
          %242 = sbr.rel (%p240) target = $region36
        $region35: #{tpu_custom_call.1} parent=27 // pred_region
          %243 = dma.done %s236, 256
        $region36: #{tpu_custom_call.1} parent=27 // pred_fallthru
          _
        %s244 = sand.u32 %s55, 1
        %s245 = scalar_lea.sflag [#allocation5], %s244
        %s246 = sand.u32 %s55, 1
        %s247 = smul.addr %s246, 16
        %s248 = scalar_lea.vmem [#allocation4], %s247
        %p249 = pneg %p68
        %p250 = pneg %p65
        %s251 = sand.u32 %s87, 1
        %s252 = scalar_lea.sflag [#allocation8], %s251
        %s253 = sand.u32 %s87, 1
        %s254 = smul.addr %s253, 16
        %s255 = scalar_lea.vmem [#allocation7], %s254
        %p256 = pneg %p100
        %p257 = pneg %p97
        %p258 = pneg %p126
        %p259 = pneg %p123
        %s260 = sand.u32 %s113, 1
        %s261 = scalar_lea.sflag [#allocation6], %s260
        %s262 = sand.u32 %s113, 1
        %s263 = smul.addr %s262, 16
        %s264 = scalar_lea.vmem [#allocation9], %s263
        %p265 = pneg %p152
        %p266 = pneg %p149
        %s267 = sand.u32 %s139, 1
        %s268 = scalar_lea.sflag [#allocation11], %s267
        %s269 = sand.u32 %s139, 1
        %s270 = smul.addr %s269, 16
        %s271 = scalar_lea.vmem [#allocation10], %s270
        %s272 = sadd.s32 %s33, %s34
        %p273 = scmp.lt.s32.totalorder %s272, 0
        %s274 = scalar_select %p273, %s272, 0
        %s275 = smul.u32 2, %s274
        %s276 = sadd.s32 %s33, %s34
        %p277 = scmp.lt.s32.totalorder %s276, 0
        %s278 = scalar_select %p277, %s276, 0
        %s279 = smul.u32 2, %s278
        %s280 = smul.u32 2, %s33
        %s281 = smul.u32 2, %s33
        %p282 = scmp.eq.s32.totalorder %s34, 0
        // Predicated region
        $region37: #{tpu_custom_call.1} parent=27 // pred_check
          %p283 = pneg %p282
        $region38: #{tpu_custom_call.1} parent=27 // pred_check_branch
          %285 = sbr.rel (%p283) target = $region40
        $region39: #{tpu_custom_call.1} parent=27 // pred_region
          %286 = vst [vmem:[%s264] sm:$0xff] 0.0
          %287 = vst [vmem:[%s264 + $0x8] sm:$0xff] 0.0
          %288 = vst [vmem:[%s271] sm:$0xff] 0.0
          %289 = vst [vmem:[%s271 + $0x8] sm:$0xff] 0.0
        $region40: #{tpu_custom_call.1} parent=27 // pred_fallthru
          _
        %v290 = vld [vmem:[%s230] sm:$0xff]
        %v291 = vld [vmem:[%s230 + $0x8] sm:$0xff]
        %v292 = vld [vmem:[%s239] sm:$0xff]
        %v293 = vld [vmem:[%s239 + $0x8] sm:$0xff]
        %s294 = sadd.s32 %s33, %s34
        %s295 = smul.u32 %s294, 16
        %v296 = vlaneseq
        %v297 = vshrl.u32 %v296, 7
        %v298 = vadd.s32 %v297, 8
        %v299 = vstv %s295
        %v300 = vadd.s32 %v299, %v297
        %v301 = vadd.s32 %v299, %v298
        %s302 = sld [smem:[#allocation3]]
        %v303 = vstv %s302
        %vm304 = vcmp.lt.s32.totalorder %v300, %v303
        %vm305 = vcmp.lt.s32.totalorder %v301, %v303
        %vm306 = vcmp.gt.f32.partialorder %v292, 0.0
        %vm307 = vcmp.gt.f32.partialorder %v293, 0.0
        %v308 = vmul.f32 %v292, 1.953125
        %v309 = vmul.f32 %v293, 1.953125
        %vm310 = vcmp.lt.f32.partialorder %v290, %v308
        %vm311 = vcmp.lt.f32.partialorder %v291, %v309
        %v312 = vmul.f32 %v290, 1.953125
        %v313 = vmul.f32 %v291, 1.953125
        %vm314 = vcmp.lt.f32.partialorder %v292, %v312
        %vm315 = vcmp.lt.f32.partialorder %v293, %v313
        %vm316 = vmand %vm310, %vm314
        %vm317 = vmand %vm311, %vm315
        %vm318 = vcmp.lt.f32.partialorder %v290, 0.0
        %vm319 = vcmp.lt.f32.partialorder %v291, 0.0
        %vm320 = vmor %vm316, %vm318
        %vm321 = vmor %vm317, %vm319
        %vm322 = vmand %vm306, %vm320
        %vm323 = vmand %vm307, %vm321
        %vm324 = vmand %vm306, %vm304
        %vm325 = vmand %vm307, %vm305
        %vm326 = vmand %vm322, %vm304
        %vm327 = vmand %vm323, %vm305
        %v328 = vld [vmem:[%s264] sm:$0xff]
        %v329 = vld [vmem:[%s264 + $0x8] sm:$0xff]
        %v330 = vsel %vm324, 1, 0
        %v331 = vsel %vm325, 1, 0
        %v332 = vcvt.s32.f32 %v330
        %v333 = vcvt.s32.f32 %v331
        %v334 = vadd.f32 %v328, %v332
        %v335 = vadd.f32 %v329, %v333
        %336 = vst [vmem:[%s264] sm:$0xff] %v334
        %337 = vst [vmem:[%s264 + $0x8] sm:$0xff] %v335
        %v338 = vld [vmem:[%s271] sm:$0xff]
        %v339 = vld [vmem:[%s271 + $0x8] sm:$0xff]
        %v340 = vsel %vm326, 1, 0
        %v341 = vsel %vm327, 1, 0
        %v342 = vcvt.s32.f32 %v340
        %v343 = vcvt.s32.f32 %v341
        %v344 = vadd.f32 %v338, %v342
        %v345 = vadd.f32 %v339, %v343
        %346 = vst [vmem:[%s271] sm:$0xff] %v344
        %347 = vst [vmem:[%s271 + $0x8] sm:$0xff] %v345
        %s348 = sand.u32 %s113, 1
        %s349 = scalar_lea.sflag [#allocation6], %s348
        %s350 = sand.u32 %s113, 1
        %s351 = smul.addr %s350, 16
        %s352 = scalar_lea.vmem [#allocation9], %s351
        %s353 = sand.u32 %s139, 1
        %s354 = scalar_lea.sflag [#allocation11], %s353
        %s355 = sand.u32 %s139, 1
        %s356 = smul.addr %s355, 16
        %s357 = scalar_lea.vmem [#allocation10], %s356
        // Predicated region
        $region41: #{tpu_custom_call.1} parent=27 // pred_check
          %p358 = pneg %p123
        $region42: #{tpu_custom_call.1} parent=27 // pred_check_branch
          %360 = sbr.rel (%p358) target = $region44
        $region43: #{tpu_custom_call.1} parent=27 // pred_region
          %s361 = smul.u32 2, %s33
          %s363 = ssub.s32 256, 256
          %364 = vsyncadd %s349, %s363
          %s365 = smul.addr %s361, 128
          %s366 = scalar_lea.hbm %s3, %s365
          %s367 = sshll.u32 %s352, 4
          %s368 = int_to_ptr.vmem [resolvable:$true] %s367
          %373 = dma.vmem_to_hbm [thread:$0]  %s368, 256, %s366, %s349, 128, 128, 8
        $region44: #{tpu_custom_call.1} parent=27 // pred_fallthru
          _
        // Predicated region
        $region45: #{tpu_custom_call.1} parent=27 // pred_check
          %p374 = pneg %p149
        $region46: #{tpu_custom_call.1} parent=27 // pred_check_branch
          %376 = sbr.rel (%p374) target = $region48
        $region47: #{tpu_custom_call.1} parent=27 // pred_region
          %s377 = smul.u32 2, %s33
          %s379 = ssub.s32 256, 256
          %380 = vsyncadd %s354, %s379
          %s381 = smul.addr %s377, 128
          %s382 = scalar_lea.hbm %s4, %s381
          %s383 = sshll.u32 %s357, 4
          %s384 = int_to_ptr.vmem [resolvable:$true] %s383
          %389 = dma.vmem_to_hbm [thread:$0]  %s384, 256, %s382, %s354, 128, 128, 8
        $region48: #{tpu_custom_call.1} parent=27 // pred_fallthru
          _
      $region28: #{tpu_custom_call.1} parent=5 // pred_fallthru
        _
      %p390 = scmp.le.s32.totalorder 2, %s24
      // Predicated region
      $region49: #{tpu_custom_call.1} parent=5 // pred_check
        %p391 = pneg %p390
      $region50: #{tpu_custom_call.1} parent=5 // pred_check_branch
        %393 = sbr.rel (%p391) target = $region52
      $region51: #{tpu_custom_call.1} parent=5 // pred_region
        %s394 = ssub.s32 %s24, 2
        // Predicated region
        $region53: #{tpu_custom_call.1} parent=51 // pred_check
          %p395 = pneg %p129
        $region54: #{tpu_custom_call.1} parent=51 // pred_check_branch
          %397 = sbr.rel (%p395) target = $region56
        $region55: #{tpu_custom_call.1} parent=51 // pred_region
          %s398 = sand.u32 %s114, 1
          %s399 = scalar_lea.sflag [#allocation6], %s398
          %s400 = sand.u32 %s114, 1
          %s401 = smul.addr %s400, 16
          %s402 = scalar_lea.vmem [#allocation9], %s401
          %403 = dma.done %s399, 256
        $region56: #{tpu_custom_call.1} parent=51 // pred_fallthru
          _
        // Predicated region
        $region57: #{tpu_custom_call.1} parent=51 // pred_check
          %p404 = pneg %p155
        $region58: #{tpu_custom_call.1} parent=51 // pred_check_branch
          %406 = sbr.rel (%p404) target = $region60
        $region59: #{tpu_custom_call.1} parent=51 // pred_region
          %s407 = sand.u32 %s140, 1
          %s408 = scalar_lea.sflag [#allocation11], %s407
          %s409 = sand.u32 %s140, 1
          %s410 = smul.addr %s409, 16
          %s411 = scalar_lea.vmem [#allocation10], %s410
          %412 = dma.done %s408, 256
        $region60: #{tpu_custom_call.1} parent=51 // pred_fallthru
          _
      $region52: #{tpu_custom_call.1} parent=5 // pred_fallthru
        _
    $region6: #{tpu_custom_call.1} parent=1 // loop_footer
      %s28 = sadd.s32 1, %s24
    $region7: #{tpu_custom_call.1} parent=1 // loop_footer_branch
      %23 = sbr.rel target = $region3
    $region8: #{tpu_custom_call.1} parent=1 // loop_exit
      _
    %413 = vsyncpa [#allocation5], 1
    %s414 = scalar_lea.sflag [#allocation5], 1
    %415 = vsyncpa %s414, 1
    %416 = vsyncpa [#allocation8], 1
    %s417 = scalar_lea.sflag [#allocation8], 1
    %418 = vsyncpa %s417, 1
    %419 = vsyncpa [#allocation6], 1
    %s420 = scalar_lea.sflag [#allocation6], 1
    %421 = vsyncpa %s420, 1
    %422 = vsyncpa [#allocation11], 1
    %s423 = scalar_lea.sflag [#allocation11], 1
    %424 = vsyncpa %s423, 1

</llo_original>
